<compile_context>
chip_gen: v7x
topology: tpu7x:2x2x1
jax: 0.10.0
libtpu: 0.0.40
codegen_flags: <defaults>
</compile_context>

<pallas_src>
import functools

import jax
import jax.numpy as jnp
from jax.experimental import pallas as pl
from jax.experimental.pallas import tpu as pltpu

MODEL_DIM = 32
MAX_LEN = 6400
BATCH = 2
SEQ = 8


def build_pe_table(max_len: int, model_dim: int) -> jnp.ndarray:
    """Same buffer the PyTorch module registers: (max_len, model_dim)."""
    position = jnp.arange(max_len, dtype=jnp.float32)[:, None]          # (L, 1)
    div_term = jnp.exp(
        jnp.arange(0, model_dim, 2, dtype=jnp.float32)
        * (-jnp.log(jnp.float32(10000.0)) / model_dim))                  # (D/2,)
    ang = position * div_term                                            # (L, D/2)
    pe = jnp.zeros((max_len, model_dim), dtype=jnp.float32)
    pe = pe.at[:, 0::2].set(jnp.sin(ang))
    pe = pe.at[:, 1::2].set(jnp.cos(ang))
    return pe


def _dropout_rnd(key, shape):
    """Uniform int32 in [0, 2^31).

    Generated with JAX's PRNG in the wrapper (not the on-chip PRNG) so the
    kernel lowers both on real TPUs and in interpret mode.
    """
    bits = jax.random.bits(key, shape, dtype=jnp.uint32)
    return (bits >> 1).astype(jnp.int32)


def _pick_lane_tile(sd: int, cap: int = 32 * 1024) -> int:
    """Largest lane tile (multiple of 128) dividing sd, capped for VMEM."""
    if sd <= cap or sd % 128 != 0:
        return sd                      # full last dim is always a legal block
    for cand in range(cap - cap % 128, 127, -128):
        if sd % cand == 0:
            return cand
    return sd


# ---------------------------------------------------------------------------
# Kernels
# ---------------------------------------------------------------------------

def pe_add_kernel(x_ref, pe_ref, out_ref):
    # x_ref: (B, TL), pe_ref: (1, TL) broadcast over the batch sublanes.
    out_ref[...] = (x_ref[...] + pe_ref[...]).astype(out_ref.dtype)


def pe_add_dropout_kernel(x_ref, pe_ref, rnd_ref, out_ref, *, threshold, scale):
    # Inverted dropout: keep iff rnd >= threshold (pure int32 compare), kept
    # elements scaled by 1/(1-p).  No float convert / multiply for the mask.
    y = x_ref[...] + pe_ref[...]
    keep = rnd_ref[...] >= jnp.int32(threshold)
    out_ref[...] = jnp.where(keep, y * jnp.float32(scale),
                             jnp.float32(0.0)).astype(out_ref.dtype)


# ---------------------------------------------------------------------------
# Wrapper
# ---------------------------------------------------------------------------

def positional_encoding(x, pe_table, *, dropout_p=0.0, training=False,
                        rng_key=None, force_pallas=False):
    """x: (B, S, D) f32.  pe_table: (max_len, D) f32.  Returns (B, S, D)."""
    B, S, D = x.shape
    use_dropout = bool(training) and float(dropout_p) > 0.0

    if not use_dropout and not force_pallas:
        # Perf feedback: at small/medium sizes a standalone kernel is pure
        # launch + DMA overhead; let XLA fuse the add into adjacent ops.
        return x + pe_table[None, :S, :]

    SD = S * D
    # Layout plumbing only: lane-dense last axis (multiple of 128 here).
    x2 = x.reshape(B, SD)
    pe2 = pe_table[:S].reshape(1, SD)

    TL = _pick_lane_tile(SD)
    grid = (SD // TL,)

    x_spec = pl.BlockSpec((B, TL), lambda j: (0, j))
    pe_spec = pl.BlockSpec((1, TL), lambda j: (0, j))
    out_spec = pl.BlockSpec((B, TL), lambda j: (0, j))
    cparams = pltpu.CompilerParams(dimension_semantics=("parallel",))

    if use_dropout:
        if rng_key is None:
            rng_key = jax.random.PRNGKey(0)
        rnd = _dropout_rnd(rng_key, (B, SD))
        threshold = min(int(round(float(dropout_p) * (1 << 31))), (1 << 31) - 1)
        scale = 1.0 / (1.0 - float(dropout_p))
        kernel = functools.partial(pe_add_dropout_kernel,
                                   threshold=threshold, scale=scale)
        out = pl.pallas_call(
            kernel,
            out_shape=jax.ShapeDtypeStruct((B, SD), x.dtype),
            grid=grid,
            in_specs=[x_spec, pe_spec,
                      pl.BlockSpec((B, TL), lambda j: (0, j))],
            out_specs=out_spec,
            input_output_aliases={0: 0},     # x -> out, elementwise in place
            compiler_params=cparams,
        )(x2, pe2, rnd)
    else:
        out = pl.pallas_call(
            pe_add_kernel,
            out_shape=jax.ShapeDtypeStruct((B, SD), x.dtype),
            grid=grid,
            in_specs=[x_spec, pe_spec],
            out_specs=out_spec,
            input_output_aliases={0: 0},
            compiler_params=cparams,
        )(x2, pe2)

    return out.reshape(B, S, D)


if __name__ == "__main__":
    key = jax.random.PRNGKey(0)
    x = jax.random.normal(key, (BATCH, SEQ, MODEL_DIM), dtype=jnp.float32)
    pe_table = build_pe_table(MAX_LEN, MODEL_DIM)

    ref = x + pe_table[None, :SEQ, :]

    # --- Eval mode, recommended (fused) path: identical to reference. -------
    out_eval_fast = positional_encoding(x, pe_table, dropout_p=0.1,
                                        training=False)
    jax.block_until_ready(out_eval_fast)
    assert jnp.allclose(out_eval_fast, ref, atol=1e-5, rtol=1e-5), \
        "eval (fast path) mismatch"

    # --- Eval mode through the Pallas kernel: must match the reference. -----
    out_eval_kernel = positional_encoding(x, pe_table, dropout_p=0.1,
                                          training=False, force_pallas=True)
    jax.block_until_ready(out_eval_kernel)
    assert jnp.allclose(out_eval_kernel, ref, atol=1e-5, rtol=1e-5), \
        "eval (kernel) mismatch"

    # --- Training mode: exact expected output rebuilt from the same RNG. ----
    p = 0.5
    drop_key = jax.random.PRNGKey(42)
    out_train = positional_encoding(x, pe_table, dropout_p=p, training=True,
                                    rng_key=drop_key)
    jax.block_until_ready(out_train)

    rnd = _dropout_rnd(drop_key, (BATCH, SEQ * MODEL_DIM)).reshape(
        BATCH, SEQ, MODEL_DIM)
    threshold = min(int(round(p * (1 << 31))), (1 << 31) - 1)
    expected = jnp.where(rnd >= threshold, ref / (1.0 - p), 0.0)
    assert jnp.allclose(out_train, expected, atol=1e-5, rtol=1e-5), \
        "training dropout mismatch"

    print("KERNEL_OK")
</pallas_src>

<mosaic_0001>
module attributes {stable_mosaic.version = 11 : i64} {
  func.func @pe_add_kernel(%arg0: i32, %arg1: memref<2x256xf32, #tpu.memory_space<vmem>>, %arg2: memref<1x256xf32, #tpu.memory_space<vmem>>, %arg3: memref<2x256xf32, #tpu.memory_space<vmem>>) attributes {dimension_semantics = [#tpu.dimension_semantics<parallel>], iteration_bounds = array<i64: 1>, scalar_prefetch = 0 : i64, scratch_operands = 0 : i64, tpu.core_type = #tpu.core_type<tc>, window_params = [{transform_indices = @transform_0, window_bounds = array<i64: 2, 256>}, {transform_indices = @transform_1, window_bounds = array<i64: 1, 256>}, {transform_indices = @transform_2, window_bounds = array<i64: 2, 256>}]} {
    %c0 = arith.constant 0 : index
    %c0_0 = arith.constant 0 : index
    %0 = vector.load %arg1[%c0, %c0_0] : memref<2x256xf32, #tpu.memory_space<vmem>>, vector<2x256xf32>
    %c0_1 = arith.constant 0 : index
    %c0_2 = arith.constant 0 : index
    %1 = vector.load %arg2[%c0_1, %c0_2] : memref<1x256xf32, #tpu.memory_space<vmem>>, vector<1x256xf32>
    %2 = vector.broadcast %1 : vector<1x256xf32> to vector<2x256xf32>
    %3 = arith.addf %0, %2 : vector<2x256xf32>
    %c0_3 = arith.constant 0 : index
    %c0_4 = arith.constant 0 : index
    %4 = vector.load %arg3[%c0_3, %c0_4] : memref<2x256xf32, #tpu.memory_space<vmem>>, vector<2x256xf32>
    tpu.vector_store %arg3[%c0_3, %c0_4], %3 {strides = array<i32>} : memref<2x256xf32, #tpu.memory_space<vmem>>, vector<2x256xf32>,
    return
  }
  func.func @transform_0(%arg0: i32) -> (i32, i32) {
    %c0_i32 = arith.constant 0 : i32
    %c0_i32_0 = arith.constant 0 : i32
    return %c0_i32, %arg0 : i32, i32
  }
  func.func @transform_1(%arg0: i32) -> (i32, i32) {
    %c0_i32 = arith.constant 0 : i32
    %c0_i32_0 = arith.constant 0 : i32
    return %c0_i32, %arg0 : i32, i32
  }
  func.func @transform_2(%arg0: i32) -> (i32, i32) {
    %c0_i32 = arith.constant 0 : i32
    %c0_i32_0 = arith.constant 0 : i32
    return %c0_i32, %arg0 : i32, i32
  }
}

</mosaic_0001>

<llo_original>
// kernel: tpu_custom_call.1
$region0: #{tpu_custom_call.1}
  #allocation0 [shape = 'u32[]', space=smem, size = 0x4, offset = 0x4, fixed_abs, tag = 'smem constant byte address 0x4 - core index']
  #allocation1 [shape = 'u32[144,128]{1,0:T(1,128)}', space=vmem, size = 0x12000, scoped, tag = 'internal scratch']
  %s0 = inlined_call_operand.hbm [shape: f32[2,256], index: 0, kind: input, shape index: {}, may-alias: {0,2}]
  %s1 = inlined_call_operand.vmem [shape: f32[1,256], index: 1, kind: input, shape index: {}]
  %s2 = inlined_call_operand.hbm [shape: f32[2,256], index: 2, kind: output, shape index: {}, may-alias: {0,2}]
  %s3 = sld [smem:[#allocation0]]
  $region22: #{tpu_custom_call.1} parent=0
    _
  %s5 = ssub.s32 1, %s3
  %s6 = scalar_select 0, %s5, %s3
  $region1: #{tpu_custom_call.1} parent=0
    #allocation2 [shape = 'u8[2048]{0}', space=vmem, size = 0x800, scoped, tag = 'input window, operand 0, single buffered']
    #allocation3 [shape = 's32[1]{0}', space=sflag, size = 0x4, scoped, tag = 'scoped memory for tpu_custom_call.1']
    #allocation4 [shape = 's32[1]{0}', space=sflag, size = 0x4, scoped, tag = 'scoped memory for tpu_custom_call.1']
    #allocation5 [shape = 'u8[2048]{0}', space=vmem, size = 0x800, scoped, tag = 'output window, operand 0, single buffered']
    %7 = vsyncpa [#allocation3], 0
    %8 = vsyncpa [#allocation4], 0
    // Predicated region
    $region2: #{tpu_custom_call.1} parent=1 // pred_check
      _
    $region3: #{tpu_custom_call.1} parent=1 // pred_check_branch
      %10 = sbr.rel (0) target = $region5
    $region4: #{tpu_custom_call.1} parent=1 // pred_region
      %s12 = ssub.s32 64, 64
      %13 = vsyncadd [#allocation3], %s12
      %s15 = sshll.u32 [#allocation2], 4
      %s16 = int_to_ptr.vmem [resolvable:$true] %s15
      %18 = dma.hbm_to_vmem [thread:$0]  %s0, 64, %s16, [#allocation3]
    $region5: #{tpu_custom_call.1} parent=1 // pred_fallthru
      _
    // Predicated region
    $region6: #{tpu_custom_call.1} parent=1 // pred_check
      _
    $region7: #{tpu_custom_call.1} parent=1 // pred_check_branch
      %20 = sbr.rel (0) target = $region9
    $region8: #{tpu_custom_call.1} parent=1 // pred_region
      _
    $region9: #{tpu_custom_call.1} parent=1 // pred_fallthru
      _
    // Predicated region
    $region10: #{tpu_custom_call.1} parent=1 // pred_check
      _
    $region11: #{tpu_custom_call.1} parent=1 // pred_check_branch
      %22 = sbr.rel (0) target = $region13
    $region12: #{tpu_custom_call.1} parent=1 // pred_region
      %23 = dma.done [#allocation3], 64
    $region13: #{tpu_custom_call.1} parent=1 // pred_fallthru
      _
    %v24 = vld [vmem:[#allocation2] sm:$0xf]
    %v25 = vld [vmem:[%s1] sm:$0x3]
    %v27 = vlaneseq
    %v28 = vshrl.u32 %v27, 7
    %v29 = vsub.s32 0, %v28
    %v30 = vrot.slane %v25, %v29
    %v31 = vlaneseq
    %v32 = vshrl.u32 %v31, 7
    %v33 = vsub.s32 1, %v32
    %v34 = vrot.slane %v25, %v33
    %v35 = vcombine.low %v30, %v34
    %v37 = vunpack.c.l.s4 1983009808
    %v38 = vunpack.c.0.s8 %v37
    %v39 = vlaneseq
    %v40 = vshrl.u32 %v39, 7
    %v41 = vsub.s32 %v38, %v40
    %v42 = vrot.slane %v35, %v41
    %v44 = vadd.f32 %v24, %v42
    %45 = vst [vmem:[#allocation5] sm:$0xf] %v44
    // Predicated region
    $region14: #{tpu_custom_call.1} parent=1 // pred_check
      _
    $region15: #{tpu_custom_call.1} parent=1 // pred_check_branch
      %47 = sbr.rel (0) target = $region17
    $region16: #{tpu_custom_call.1} parent=1 // pred_region
      %s49 = ssub.s32 64, 64
      %50 = vsyncadd [#allocation4], %s49
      %s52 = sshll.u32 [#allocation5], 4
      %s53 = int_to_ptr.vmem [resolvable:$true] %s52
      %55 = dma.vmem_to_hbm [thread:$0]  %s53, 64, %s2, [#allocation4]
    $region17: #{tpu_custom_call.1} parent=1 // pred_fallthru
      _
    // Predicated region
    $region18: #{tpu_custom_call.1} parent=1 // pred_check
      _
    $region19: #{tpu_custom_call.1} parent=1 // pred_check_branch
      %57 = sbr.rel (0) target = $region21
    $region20: #{tpu_custom_call.1} parent=1 // pred_region
      %58 = dma.done [#allocation4], 64
    $region21: #{tpu_custom_call.1} parent=1 // pred_fallthru
      _
    %59 = vsyncpa [#allocation3], 1
    %60 = vsyncpa [#allocation4], 1

</llo_original>
